<compile_context>
chip_gen: v6e
topology: v6e:2x2x1
jax: 0.10.0
libtpu: 0.0.40
codegen_flags: <defaults>
</compile_context>

<pallas_src>
import functools

import jax
import jax.numpy as jnp
import numpy as np
from jax.experimental import pallas as pl
from jax.experimental.pallas import tpu as pltpu


_LANE = 128             # lane width of each tile (last dim, full vreg lanes)
_MAX_BLOCK_ROWS = 1024  # sublane rows per block -> 512 KiB f32 per block


def _round_up(a, b):
    return ((a + b - 1) // b) * b


def _dyrelu_apply_kernel(coef_ref, x_ref, o_ref, *, k):
    """Streaming apply: o = max_j (x * a_j + b_j) with per-batch scalar coefs.

    coef_ref : SMEM (B, 2k) float32   (whole array, read as scalars)
    x_ref    : VMEM (1, Rt, LANE) tile of the flattened input
    o_ref    : VMEM (1, Rt, LANE) tile of the output
    """
    b = pl.program_id(0)
    x = x_ref[0]                                           # (Rt, LANE)
    y = x * coef_ref[b, 0] + coef_ref[b, k]
    for j in range(1, k):
        y = jnp.maximum(y, x * coef_ref[b, j] + coef_ref[b, k + j])
    o_ref[0] = y.astype(o_ref.dtype)


def dyrelu_a(x, w1, b1, w2, b2, lambdas, init_v, *, k=2):
    """DyReLU-A forward. x: [B, C, H, W] float32 -> [B, C, H, W]."""
    B, C, H, W = x.shape
    N = C * H * W

    # ---- gate: batched over B in plain JAX (one (B,C)@(C,hidden) and one
    #      (B,hidden)@(hidden,2k) matmul instead of per-batch N=1 matvecs) ----
    theta = jnp.mean(x, axis=(2, 3))                         # (B, C)
    h = jnp.maximum(theta @ w1.T + b1, 0.0)                  # (B, hidden)
    t = h @ w2.T + b2                                        # (B, 2k)
    t = 2.0 * jax.nn.sigmoid(t) - 1.0
    coefs = (t * lambdas + init_v).astype(jnp.float32)       # (B, 2k)

    # ---- lane-dense tiling of the elementwise apply ----
    R = pl.cdiv(N, _LANE)
    Rt = min(_round_up(R, 8), _MAX_BLOCK_ROWS)               # multiple of 8
    R_pad = _round_up(R, Rt)
    N_pad = R_pad * _LANE

    xf = x.reshape(B, N)
    if N_pad != N:
        xf = jnp.pad(xf, ((0, 0), (0, N_pad - N)))
    x3 = xf.reshape(B, R_pad, _LANE)

    grid = (B, R_pad // Rt)
    out = pl.pallas_call(
        functools.partial(_dyrelu_apply_kernel, k=k),
        out_shape=jax.ShapeDtypeStruct((B, R_pad, _LANE), x.dtype),
        grid_spec=pltpu.PrefetchScalarGridSpec(
            num_scalar_prefetch=0,
            grid=grid,
            in_specs=[
                # per-batch coefficients, whole array in SMEM
                pl.BlockSpec(memory_space=pltpu.MemorySpace.SMEM),
                # lane-dense input tile
                pl.BlockSpec((1, Rt, _LANE), lambda b, r: (b, r, 0)),
            ],
            out_specs=pl.BlockSpec((1, Rt, _LANE), lambda b, r: (b, r, 0)),
        ),
        compiler_params=pltpu.CompilerParams(
            dimension_semantics=("parallel", "parallel")),
    )(coefs, x3)

    return out.reshape(B, N_pad)[:, :N].reshape(B, C, H, W)


def dyrelu_a_ref(x, w1, b1, w2, b2, lambdas, init_v, *, k=2):
    """Pure-JAX reference matching the PyTorch DyReLUA forward."""
    theta = x.mean(axis=(-1, -2))                            # (B, C)
    h = jnp.maximum(theta @ w1.T + b1, 0.0)                  # (B, hidden)
    t = h @ w2.T + b2                                        # (B, 2k)
    t = 2.0 * jax.nn.sigmoid(t) - 1.0
    coefs = t * lambdas + init_v                             # (B, 2k)
    a = coefs[:, :k]                                         # (B, k)
    b_off = coefs[:, k:]                                     # (B, k)
    y = (x[..., None] * a[:, None, None, None, :]
         + b_off[:, None, None, None, :])                    # (B,C,H,W,k)
    return y.max(axis=-1)


if __name__ == "__main__":
    B, C, H, W = 2, 8, 16, 16
    reduction, k = 4, 2
    hidden = C // reduction

    key = jax.random.PRNGKey(0)
    kx, k1, k2, k3, k4 = jax.random.split(key, 5)

    x = jax.random.normal(kx, (B, C, H, W), dtype=jnp.float32)

    # Deterministic synthetic parameters (shapes match nn.Linear of DyReLUA).
    w1 = 0.3 * jax.random.normal(k1, (hidden, C), dtype=jnp.float32)
    b1 = 0.1 * jax.random.normal(k2, (hidden,), dtype=jnp.float32)
    w2 = 0.3 * jax.random.normal(k3, (2 * k, hidden), dtype=jnp.float32)
    b2 = 0.1 * jax.random.normal(k4, (2 * k,), dtype=jnp.float32)

    lambdas = jnp.array([1.0] * k + [0.5] * k, dtype=jnp.float32)
    init_v = jnp.array([1.0] + [0.0] * (2 * k - 1), dtype=jnp.float32)

    out = dyrelu_a(x, w1, b1, w2, b2, lambdas, init_v, k=k)
    out = jax.block_until_ready(out)

    ref = dyrelu_a_ref(x, w1, b1, w2, b2, lambdas, init_v, k=k)
    np.testing.assert_allclose(np.asarray(out), np.asarray(ref),
                               rtol=1e-5, atol=1e-5)
    print("KERNEL_OK")
</pallas_src>

<mosaic_0001>
module attributes {stable_mosaic.version = 11 : i64} {
  func.func @_dyrelu_apply_kernel(%arg0: i32, %arg1: i32, %arg2: memref<2x4xf32, #tpu.memory_space<smem>>, %arg3: memref<1x16x128xf32, #tpu.memory_space<vmem>>, %arg4: memref<1x16x128xf32, #tpu.memory_space<vmem>>) attributes {dimension_semantics = [#tpu.dimension_semantics<parallel>, #tpu.dimension_semantics<parallel>], iteration_bounds = array<i64: 2, 1>, scalar_prefetch = 0 : i64, scratch_operands = 0 : i64, tpu.core_type = #tpu.core_type<tc>, window_params = [{transform_indices = @transform_0, window_bounds = array<i64: 2, 4>}, {transform_indices = @transform_1, window_bounds = array<i64: 1, 16, 128>}, {transform_indices = @transform_2, window_bounds = array<i64: 1, 16, 128>}]} {
    %c0 = arith.constant 0 : index
    %c0_0 = arith.constant 0 : index
    %c0_1 = arith.constant 0 : index
    %0 = vector.load %arg3[%c0, %c0_0, %c0_1] : memref<1x16x128xf32, #tpu.memory_space<vmem>>, vector<1x16x128xf32>
    %1 = vector.shape_cast %0 : vector<1x16x128xf32> to vector<16x128xf32>
    %2 = arith.index_cast %arg0 : i32 to index
    %c0_2 = arith.constant 0 : index
    %3 = memref.load %arg2[%2, %c0_2] : memref<2x4xf32, #tpu.memory_space<smem>>
    %4 = vector.broadcast %3 : f32 to vector<16x128xf32>
    %5 = arith.mulf %1, %4 : vector<16x128xf32>
    %6 = arith.index_cast %arg0 : i32 to index
    %c2 = arith.constant 2 : index
    %7 = memref.load %arg2[%6, %c2] : memref<2x4xf32, #tpu.memory_space<smem>>
    %8 = vector.broadcast %7 : f32 to vector<16x128xf32>
    %9 = arith.addf %5, %8 : vector<16x128xf32>
    %10 = arith.index_cast %arg0 : i32 to index
    %c1 = arith.constant 1 : index
    %11 = memref.load %arg2[%10, %c1] : memref<2x4xf32, #tpu.memory_space<smem>>
    %12 = vector.broadcast %11 : f32 to vector<16x128xf32>
    %13 = arith.mulf %1, %12 : vector<16x128xf32>
    %14 = arith.index_cast %arg0 : i32 to index
    %c3 = arith.constant 3 : index
    %15 = memref.load %arg2[%14, %c3] : memref<2x4xf32, #tpu.memory_space<smem>>
    %16 = vector.broadcast %15 : f32 to vector<16x128xf32>
    %17 = arith.addf %13, %16 : vector<16x128xf32>
    %18 = arith.maximumf %9, %17 : vector<16x128xf32>
    %c0_3 = arith.constant 0 : index
    %c0_4 = arith.constant 0 : index
    %c0_5 = arith.constant 0 : index
    %19 = vector.load %arg4[%c0_3, %c0_4, %c0_5] : memref<1x16x128xf32, #tpu.memory_space<vmem>>, vector<1x16x128xf32>
    %20 = vector.shape_cast %19 : vector<1x16x128xf32> to vector<16x128xf32>
    %21 = vector.shape_cast %18 : vector<16x128xf32> to vector<1x16x128xf32>
    tpu.vector_store %arg4[%c0_3, %c0_4, %c0_5], %21 {strides = array<i32>} : memref<1x16x128xf32, #tpu.memory_space<vmem>>, vector<1x16x128xf32>,
    return
  }
  func.func @transform_0(%arg0: i32, %arg1: i32) -> (i32, i32) {
    %c0_i32 = arith.constant 0 : i32
    %c0_i32_0 = arith.constant 0 : i32
    %c0_i32_1 = arith.constant 0 : i32
    return %c0_i32, %c0_i32_0 : i32, i32
  }
  func.func @transform_1(%arg0: i32, %arg1: i32) -> (i32, i32, i32) {
    %c0_i32 = arith.constant 0 : i32
    %c0_i32_0 = arith.constant 0 : i32
    return %arg0, %arg1, %c0_i32 : i32, i32, i32
  }
  func.func @transform_2(%arg0: i32, %arg1: i32) -> (i32, i32, i32) {
    %c0_i32 = arith.constant 0 : i32
    %c0_i32_0 = arith.constant 0 : i32
    return %arg0, %arg1, %c0_i32 : i32, i32, i32
  }
}

</mosaic_0001>

<llo_original>
// kernel: tpu_custom_call.1
$region0: #{tpu_custom_call.1}
  #allocation0 [shape = 'u32[]', space=smem, size = 0x4, offset = 0x4, fixed_abs, tag = 'smem constant byte address 0x4 - core index']
  #allocation1 [shape = 'u32[144,128]{1,0:T(1,128)}', space=vmem, size = 0x12000, scoped, tag = 'internal scratch']
  %s0 = inlined_call_operand.hbm [shape: f32[2,4], index: 0, kind: input, shape index: {}]
  %s1 = inlined_call_operand.hbm [shape: f32[2,16,128], index: 1, kind: input, shape index: {}]
  %s2 = inlined_call_operand.hbm [shape: f32[2,16,128], index: 2, kind: output, shape index: {}]
  %s3 = sld [smem:[#allocation0]]
  $region49: #{tpu_custom_call.1} parent=0
    _
  %s5 = ssub.s32 1, %s3
  %s6 = scalar_select 0, %s5, %s3
  $region1: #{tpu_custom_call.1} parent=0
    #allocation2 [shape = 'u8[1024]{0}', space=smem, size = 0x400, scoped, tag = 'input window, operand 0, single buffered']
    #allocation3 [shape = 's32[2]{0}', space=sflag, size = 0x8, scoped, tag = 'scoped memory for tpu_custom_call.1']
    #allocation4 [shape = 's32[2]{0}', space=sflag, size = 0x8, scoped, tag = 'scoped memory for tpu_custom_call.1']
    #allocation5 [shape = 's32[2]{0}', space=sflag, size = 0x8, scoped, tag = 'scoped memory for tpu_custom_call.1']
    #allocation6 [shape = 'u8[16384]{0}', space=vmem, size = 0x4000, scoped, tag = 'input window, operand 1']
    #allocation7 [shape = 'u8[16384]{0}', space=vmem, size = 0x4000, scoped, tag = 'output window, operand 0']
    %7 = vsyncpa [#allocation5], 0
    %8 = vsyncpa [#allocation3], 0
    %s9 = scalar_lea.sflag [#allocation3], 1
    %10 = vsyncpa %s9, 0
    %11 = vsyncpa [#allocation4], 0
    %s12 = scalar_lea.sflag [#allocation4], 1
    %13 = vsyncpa %s12, 0
    loop: start=0, step=1, limit=4
    $region2: #{tpu_custom_call.1} parent=1 // loop_pre_header
      _
    $region3: #{tpu_custom_call.1} parent=1 // loop_header
      %s15 = sphi 0, %s19
      %p16 = scmp.ge.s32.totalorder %s15, 4
      %s22 = sphi 0, %s34
      %s23 = sphi 0, %s30
      %s24 = sphi 0, %s22
      %s25 = sphi 0, %s23
      %s26 = sphi 0, %s24
      %s27 = sphi 0, %s25
      %s35 = sphi 0, %s35
      %s37 = sphi 0, %s35
      %s38 = sphi 0, %s37
      %s52 = sphi 0, %s38
      %s60 = sphi 0, %s62
      %s63 = sphi 0, %s60
      %s64 = sphi 0, %s63
      %s80 = sphi 0, %s64
      %s88 = sphi 0, %s90
      %s91 = sphi 0, %s88
      %s92 = sphi 0, %s91
      %s108 = sphi 0, %s92
    $region4: #{tpu_custom_call.1} parent=1 // loop_header_branch
      %18 = sbr.rel (%p16) target = $region8
    $region5: #{tpu_custom_call.1} parent=1 // loop_body
      %s20 = ssub.s32 %s15, 1
      %s21 = ssub.s32 %s15, 2
      %s28 = sadd.s32 1, %s23
      %p29 = scmp.ge.s32.totalorder %s28, 1
      %s30 = scalar_select %p29, 0, %s28
      %s31 = sadd.s32 1, %s22
      %s32 = scalar_select %p29, %s31, %s22
      %p33 = scmp.ge.s32.totalorder %s32, 2
      %s34 = scalar_select %p33, 0, %s32
      %s36 = sadd.s32 %s35, 1
      %p39 = scmp.eq.s32.totalorder %s15, 1
      %p40 = scmp.ne.s32.totalorder %s35, %s37
      %p41 = scmp.eq.s32.totalorder %s15, 0
      %p42 = por %p40, %p41
      %p43 = scmp.ne.s32.totalorder %s35, %s37
      %p44 = scmp.eq.s32.totalorder %s20, 1
      %p45 = por %p43, %p44
      %p46 = scmp.ne.s32.totalorder %s37, %s38
      %p47 = scmp.eq.s32.totalorder %s20, 0
      %p48 = por %p46, %p47
      %p49 = scmp.ne.s32.totalorder %s37, %s38
      %p50 = scmp.eq.s32.totalorder %s21, 1
      %p51 = por %p49, %p50
      %p53 = scmp.ne.s32.totalorder %s38, %s52
      %p54 = scmp.eq.s32.totalorder %s21, 0
      %p55 = por %p53, %p54
      %s56 = ssub.s32 %s22, %s34
      %s57 = ssub.s32 %s23, %s30
      %s58 = sor.u32 %s56, %s57
      %p59 = scmp.eq.s32.totalorder %s58, 0
      %s61 = sadd.s32 %s60, 1
      %s62 = scalar_select %p59, %s60, %s61
      %p65 = pneg %p59
      %p66 = scmp.eq.s32.totalorder %s15, 1
      %p67 = por %p65, %p66
      %p68 = scmp.ne.s32.totalorder %s60, %s63
      %p69 = scmp.eq.s32.totalorder %s15, 0
      %p70 = por %p68, %p69
      %p71 = scmp.ne.s32.totalorder %s60, %s63
      %p72 = scmp.eq.s32.totalorder %s20, 1
      %p73 = por %p71, %p72
      %p74 = scmp.ne.s32.totalorder %s63, %s64
      %p75 = scmp.eq.s32.totalorder %s20, 0
      %p76 = por %p74, %p75
      %p77 = scmp.ne.s32.totalorder %s63, %s64
      %p78 = scmp.eq.s32.totalorder %s21, 1
      %p79 = por %p77, %p78
      %p81 = scmp.ne.s32.totalorder %s64, %s80
      %p82 = scmp.eq.s32.totalorder %s21, 0
      %p83 = por %p81, %p82
      %s84 = ssub.s32 %s22, %s34
      %s85 = ssub.s32 %s23, %s30
      %s86 = sor.u32 %s84, %s85
      %p87 = scmp.eq.s32.totalorder %s86, 0
      %s89 = sadd.s32 %s88, 1
      %s90 = scalar_select %p87, %s88, %s89
      %p93 = pneg %p87
      %p94 = scmp.eq.s32.totalorder %s15, 1
      %p95 = por %p93, %p94
      %p96 = scmp.ne.s32.totalorder %s88, %s91
      %p97 = scmp.eq.s32.totalorder %s15, 0
      %p98 = por %p96, %p97
      %p99 = scmp.ne.s32.totalorder %s88, %s91
      %p100 = scmp.eq.s32.totalorder %s20, 1
      %p101 = por %p99, %p100
      %p102 = scmp.ne.s32.totalorder %s91, %s92
      %p103 = scmp.eq.s32.totalorder %s20, 0
      %p104 = por %p102, %p103
      %p105 = scmp.ne.s32.totalorder %s91, %s92
      %p106 = scmp.eq.s32.totalorder %s21, 1
      %p107 = por %p105, %p106
      %p109 = scmp.ne.s32.totalorder %s92, %s108
      %p110 = scmp.eq.s32.totalorder %s21, 0
      %p111 = por %p109, %p110
      %p112 = scmp.le.s32.totalorder 1, %s15
      %p113 = scmp.lt.s32.totalorder %s15, 3
      %p114 = pnand %p112, %p113
      %p115 = pneg %p114
      // Predicated region
      $region9: #{tpu_custom_call.1} parent=5 // pred_check
        _
      $region10: #{tpu_custom_call.1} parent=5 // pred_check_branch
        %117 = sbr.rel (%p114) target = $region12
      $region11: #{tpu_custom_call.1} parent=5 // pred_region
        %s118 = ssub.s32 %s15, 1
        // Predicated region
        $region13: #{tpu_custom_call.1} parent=11 // pred_check
          %p119 = pneg %p48
        $region14: #{tpu_custom_call.1} parent=11 // pred_check_branch
          %121 = sbr.rel (%p119) target = $region16
        $region15: #{tpu_custom_call.1} parent=11 // pred_region
          %s123 = ssub.s32 32, 32
          %124 = vsyncadd [#allocation5], %s123
          %127 = dma.hbm_to_smem %s0, 32, [#allocation2], [#allocation5]
        $region16: #{tpu_custom_call.1} parent=11 // pred_fallthru
          _
      $region12: #{tpu_custom_call.1} parent=5 // pred_fallthru
        _
      %p128 = scmp.lt.s32.totalorder %s15, 2
      // Predicated region
      $region17: #{tpu_custom_call.1} parent=5 // pred_check
        %p129 = pneg %p128
      $region18: #{tpu_custom_call.1} parent=5 // pred_check_branch
        %131 = sbr.rel (%p129) target = $region20
      $region19: #{tpu_custom_call.1} parent=5 // pred_region
        // Predicated region
        $region21: #{tpu_custom_call.1} parent=19 // pred_check
          %p132 = pneg %p70
        $region22: #{tpu_custom_call.1} parent=19 // pred_check_branch
          %134 = sbr.rel (%p132) target = $region24
        $region23: #{tpu_custom_call.1} parent=19 // pred_region
          %s135 = sand.u32 %s60, 1
          %s136 = scalar_lea.sflag [#allocation3], %s135
          %s137 = sand.u32 %s60, 1
          %s138 = smul.addr %s137, 16
          %s139 = scalar_lea.vmem [#allocation6], %s138
          %s140 = smul.u32 2, %s23
          %s142 = ssub.s32 256, 256
          %143 = vsyncadd %s136, %s142
          %s144 = smul.addr %s22, 2
          %s145 = sadd.s32 %s140, %s144
          %s146 = smul.addr %s145, 128
          %s147 = scalar_lea.hbm %s1, %s146
          %s148 = sshll.u32 %s139, 4
          %s149 = int_to_ptr.vmem [resolvable:$true] %s148
          %154 = dma.hbm_to_vmem [thread:$0]  %s147, 256, %s149, %s136, 128, 128, 8
        $region24: #{tpu_custom_call.1} parent=19 // pred_fallthru
          _
      $region20: #{tpu_custom_call.1} parent=5 // pred_fallthru
        _
      %p155 = scmp.le.s32.totalorder 1, %s15
      %p156 = scmp.lt.s32.totalorder %s15, 3
      %p157 = pnand %p155, %p156
      %p158 = pneg %p157
      // Predicated region
      $region25: #{tpu_custom_call.1} parent=5 // pred_check
        _
      $region26: #{tpu_custom_call.1} parent=5 // pred_check_branch
        %160 = sbr.rel (%p157) target = $region28
      $region27: #{tpu_custom_call.1} parent=5 // pred_region
        %s161 = ssub.s32 %s15, 1
        // Predicated region
        $region29: #{tpu_custom_call.1} parent=27 // pred_check
          %p162 = pneg %p48
        $region30: #{tpu_custom_call.1} parent=27 // pred_check_branch
          %164 = sbr.rel (%p162) target = $region32
        $region31: #{tpu_custom_call.1} parent=27 // pred_region
          %165 = dma.done [#allocation5], 32
        $region32: #{tpu_custom_call.1} parent=27 // pred_fallthru
          _
        %s166 = sand.u32 %s63, 1
        %s167 = scalar_lea.sflag [#allocation3], %s166
        %s168 = sand.u32 %s63, 1
        %s169 = smul.addr %s168, 16
        %s170 = scalar_lea.vmem [#allocation6], %s169
        // Predicated region
        $region33: #{tpu_custom_call.1} parent=27 // pred_check
          %p171 = pneg %p76
        $region34: #{tpu_custom_call.1} parent=27 // pred_check_branch
          %173 = sbr.rel (%p171) target = $region36
        $region35: #{tpu_custom_call.1} parent=27 // pred_region
          %174 = dma.done %s167, 256
        $region36: #{tpu_custom_call.1} parent=27 // pred_fallthru
          _
        %175 = sfence
        %p176 = pneg %p48
        %p177 = pneg %p45
        %s178 = sand.u32 %s63, 1
        %s179 = scalar_lea.sflag [#allocation3], %s178
        %s180 = sand.u32 %s63, 1
        %s181 = smul.addr %s180, 16
        %s182 = scalar_lea.vmem [#allocation6], %s181
        %p183 = pneg %p76
        %p184 = pneg %p73
        %p185 = pneg %p104
        %p186 = pneg %p101
        %s187 = sand.u32 %s91, 1
        %s188 = scalar_lea.sflag [#allocation4], %s187
        %s189 = sand.u32 %s91, 1
        %s190 = smul.addr %s189, 16
        %s191 = scalar_lea.vmem [#allocation7], %s190
        %s192 = smul.u32 2, %s25
        %s193 = smul.u32 2, %s25
        %v194 = vld [vmem:[%s170] sm:$0xff]
        %v195 = vld [vmem:[%s170 + $0x8] sm:$0xff]
        %s196 = smul.u32 %s24, 128
        %s197 = sld [smem:[#allocation2 + %s196]]
        %v198 = vstv %s197
        %v199 = vmul.f32 %v194, %v198
        %v200 = vmul.f32 %v195, %v198
        %s201 = sadd.s32 %s196, 2
        %s202 = sld [smem:[#allocation2 + %s201]]
        %v203 = vstv %s202
        %v204 = vadd.f32 %v199, %v203
        %v205 = vadd.f32 %v200, %v203
        %s206 = sadd.s32 %s196, 1
        %s207 = sld [smem:[#allocation2 + %s206]]
        %v208 = vstv %s207
        %v209 = vmul.f32 %v194, %v208
        %v210 = vmul.f32 %v195, %v208
        %s211 = sadd.s32 %s196, 3
        %s212 = sld [smem:[#allocation2 + %s211]]
        %v213 = vstv %s212
        %v214 = vadd.f32 %v209, %v213
        %v215 = vadd.f32 %v210, %v213
        %v216 = vmax.f32 %v204, %v214
        %v217 = vmax.f32 %v205, %v215
        %218 = vst [vmem:[%s191] sm:$0xff] %v216
        %219 = vst [vmem:[%s191 + $0x8] sm:$0xff] %v217
        %s220 = sand.u32 %s91, 1
        %s221 = scalar_lea.sflag [#allocation4], %s220
        %s222 = sand.u32 %s91, 1
        %s223 = smul.addr %s222, 16
        %s224 = scalar_lea.vmem [#allocation7], %s223
        // Predicated region
        $region37: #{tpu_custom_call.1} parent=27 // pred_check
          %p225 = pneg %p101
        $region38: #{tpu_custom_call.1} parent=27 // pred_check_branch
          %227 = sbr.rel (%p225) target = $region40
        $region39: #{tpu_custom_call.1} parent=27 // pred_region
          %s228 = smul.u32 2, %s25
          %s230 = ssub.s32 256, 256
          %231 = vsyncadd %s221, %s230
          %s232 = smul.addr %s24, 2
          %s233 = sadd.s32 %s228, %s232
          %s234 = smul.addr %s233, 128
          %s235 = scalar_lea.hbm %s2, %s234
          %s236 = sshll.u32 %s224, 4
          %s237 = int_to_ptr.vmem [resolvable:$true] %s236
          %242 = dma.vmem_to_hbm [thread:$0]  %s237, 256, %s235, %s221, 128, 128, 8
        $region40: #{tpu_custom_call.1} parent=27 // pred_fallthru
          _
      $region28: #{tpu_custom_call.1} parent=5 // pred_fallthru
        _
      %p243 = scmp.le.s32.totalorder 2, %s15
      // Predicated region
      $region41: #{tpu_custom_call.1} parent=5 // pred_check
        %p244 = pneg %p243
      $region42: #{tpu_custom_call.1} parent=5 // pred_check_branch
        %246 = sbr.rel (%p244) target = $region44
      $region43: #{tpu_custom_call.1} parent=5 // pred_region
        %s247 = ssub.s32 %s15, 2
        // Predicated region
        $region45: #{tpu_custom_call.1} parent=43 // pred_check
          %p248 = pneg %p107
        $region46: #{tpu_custom_call.1} parent=43 // pred_check_branch
          %250 = sbr.rel (%p248) target = $region48
        $region47: #{tpu_custom_call.1} parent=43 // pred_region
          %s251 = sand.u32 %s92, 1
          %s252 = scalar_lea.sflag [#allocation4], %s251
          %s253 = sand.u32 %s92, 1
          %s254 = smul.addr %s253, 16
          %s255 = scalar_lea.vmem [#allocation7], %s254
          %256 = dma.done %s252, 256
        $region48: #{tpu_custom_call.1} parent=43 // pred_fallthru
          _
      $region44: #{tpu_custom_call.1} parent=5 // pred_fallthru
        _
    $region6: #{tpu_custom_call.1} parent=1 // loop_footer
      %s19 = sadd.s32 1, %s15
    $region7: #{tpu_custom_call.1} parent=1 // loop_footer_branch
      %14 = sbr.rel target = $region3
    $region8: #{tpu_custom_call.1} parent=1 // loop_exit
      _
    %257 = vsyncpa [#allocation3], 1
    %s258 = scalar_lea.sflag [#allocation3], 1
    %259 = vsyncpa %s258, 1
    %260 = vsyncpa [#allocation4], 1
    %s261 = scalar_lea.sflag [#allocation4], 1
    %262 = vsyncpa %s261, 1
    %263 = vsyncpa [#allocation5], 1
    %s264 = scalar_lea.sflag [#allocation5], 1
    %265 = vsyncpa %s264, 1

</llo_original>
